<compile_context>
chip_gen: v7x
topology: tpu7x:2x2x1
jax: 0.10.0
libtpu: 0.0.40
codegen_flags: <defaults>
</compile_context>

<pallas_src>
import jax
import jax.numpy as jnp
from jax.experimental import pallas as pl
from jax.experimental.pallas import tpu as pltpu

OUT_PAD = 128  # lane-dense padded width of the final (.., 1) output


def fraud_detector_kernel(
    x_ref,
    w1_ref, b1_ref,
    w2_ref, b2_ref,
    w3_ref, b3_ref,
    w4_ref, b4_ref,
    w5_ref, b5_ref,
    o_ref,
):
    # All BN scale/shift is pre-folded into the weights; Dropout = identity (eval mode).
    h = x_ref[...].astype(jnp.bfloat16)

    # layer1: Linear(F, 256) + (folded BN) + ReLU
    h = jnp.dot(h, w1_ref[...], preferred_element_type=jnp.float32) + b1_ref[...]
    h = jnp.maximum(h, 0.0).astype(jnp.bfloat16)

    # layer2: Linear(256, 128) + (folded BN) + ReLU
    h = jnp.dot(h, w2_ref[...], preferred_element_type=jnp.float32) + b2_ref[...]
    h = jnp.maximum(h, 0.0).astype(jnp.bfloat16)

    # layer3: Linear(128, 64) + (folded BN) + ReLU
    h = jnp.dot(h, w3_ref[...], preferred_element_type=jnp.float32) + b3_ref[...]
    h = jnp.maximum(h, 0.0).astype(jnp.bfloat16)

    # layer4: Linear(64, 32) + (folded BN) + ReLU
    h = jnp.dot(h, w4_ref[...], preferred_element_type=jnp.float32) + b4_ref[...]
    h = jnp.maximum(h, 0.0).astype(jnp.bfloat16)

    # output: Linear(32, 1) padded to 128 lanes + Sigmoid
    z = jnp.dot(h, w5_ref[...], preferred_element_type=jnp.float32) + b5_ref[...]
    o_ref[...] = pl.reciprocal(1.0 + jnp.exp(-z), approx=True)


def _round_up(n, m):
    return (n + m - 1) // m * m


def _fold_bn(gamma, beta, mean, var, eps=1e-5):
    scale = gamma / jnp.sqrt(var + eps)
    shift = beta - mean * scale
    return scale, shift


def fold_params(params):
    """Fold every BatchNorm into the adjacent Linear weights/biases (host-side, one time).

    Returns a list of 5 (W, b) pairs with W in (in, out) layout.
    """
    s0, t0 = _fold_bn(**params["bn0"])

    folded = []
    # layer1 absorbs the input BN on its left and bn1 on its right:
    #   relu(((x*s0 + t0) @ W1 + b1) * s1 + t1)
    # = relu(x @ (s0[:,None]*W1*s1[None,:]) + ((t0@W1 + b1)*s1 + t1))
    w1 = params["w1"] * s0[:, None]
    b1 = t0 @ params["w1"] + params["b1"]
    s1, t1 = _fold_bn(**params["bn1"])
    folded.append((w1 * s1[None, :], b1 * s1 + t1))

    for li in range(2, 5):
        sl, tl = _fold_bn(**params[f"bn{li}"])
        folded.append((params[f"w{li}"] * sl[None, :], params[f"b{li}"] * sl + tl))

    # Output layer: pad to OUT_PAD lanes so the kernel store is lane-dense.
    w5 = jnp.zeros((params["w5"].shape[0], OUT_PAD), jnp.float32).at[:, :1].set(params["w5"])
    b5 = jnp.zeros((OUT_PAD,), jnp.float32).at[:1].set(params["b5"])
    folded.append((w5, b5))
    return folded


def fraud_detector_forward(x, params, *, tile_b=512):
    B, F = x.shape
    folded = fold_params(params)

    # Tile the batch (f32 sublane multiple of 8); pad B up to a whole number of tiles.
    tile_b = min(tile_b, _round_up(B, 8))
    b_padded = _round_up(B, tile_b)
    if b_padded != B:
        x = jnp.pad(x, ((0, b_padded - B), (0, 0)))

    # Weights in bf16 (MXU-native), biases in f32 (added to the f32 accumulator).
    args = [x]
    in_specs = [pl.BlockSpec((tile_b, F), lambda i: (i, 0))]
    for w, b in folded:
        args.append(w.astype(jnp.bfloat16))
        args.append(b.reshape(1, -1).astype(jnp.float32))
        in_specs.append(pl.BlockSpec(w.shape, lambda i: (0, 0)))          # VMEM-resident
        in_specs.append(pl.BlockSpec((1, b.shape[-1]), lambda i: (0, 0)))  # VMEM-resident

    flops = 2 * b_padded * sum(w.shape[0] * w.shape[1] for w, _ in folded)
    bytes_accessed = (
        b_padded * F * 4
        + b_padded * OUT_PAD * 4
        + sum(w.size * 2 + b.size * 4 for w, b in folded)
    )

    out = pl.pallas_call(
        fraud_detector_kernel,
        out_shape=jax.ShapeDtypeStruct((b_padded, OUT_PAD), jnp.float32),
        grid=(b_padded // tile_b,),
        in_specs=in_specs,
        out_specs=pl.BlockSpec((tile_b, OUT_PAD), lambda i: (i, 0)),
        compiler_params=pltpu.CompilerParams(
            dimension_semantics=("parallel",),  # shard batch tiles across TCs (v7x megacore)
        ),
        cost_estimate=pl.CostEstimate(
            flops=flops,
            transcendentals=b_padded * OUT_PAD,
            bytes_accessed=bytes_accessed,
        ),
    )(*args)

    # Only column 0 of the lane-padded output is real.
    return out[:B, :1]


def make_params(input_size, key):
    """Deterministic synthetic parameters matching the PyTorch module's shapes."""
    dims = [input_size, 256, 128, 64, 32, 1]
    params = {}
    ks = jax.random.split(key, 64)
    ki = 0

    def nxt():
        nonlocal ki
        k = ks[ki]
        ki += 1
        return k

    # Input BatchNorm1d(input_size)
    params["bn0"] = dict(
        gamma=jax.random.uniform(nxt(), (input_size,), jnp.float32, 0.5, 1.5),
        beta=jax.random.normal(nxt(), (input_size,), jnp.float32) * 0.1,
        mean=jax.random.normal(nxt(), (input_size,), jnp.float32) * 0.1,
        var=jax.random.uniform(nxt(), (input_size,), jnp.float32, 0.5, 1.5),
    )
    # Hidden layers: Linear (stored pre-transposed as (in, out)) + BatchNorm1d
    for li in range(1, 5):
        fin, fout = dims[li - 1], dims[li]
        bound = 1.0 / jnp.sqrt(jnp.float32(fin))
        params[f"w{li}"] = jax.random.uniform(nxt(), (fin, fout), jnp.float32, -bound, bound)
        params[f"b{li}"] = jax.random.uniform(nxt(), (fout,), jnp.float32, -bound, bound)
        params[f"bn{li}"] = dict(
            gamma=jax.random.uniform(nxt(), (fout,), jnp.float32, 0.5, 1.5),
            beta=jax.random.normal(nxt(), (fout,), jnp.float32) * 0.1,
            mean=jax.random.normal(nxt(), (fout,), jnp.float32) * 0.1,
            var=jax.random.uniform(nxt(), (fout,), jnp.float32, 0.5, 1.5),
        )
    # Output Linear(32, 1)
    bound = 1.0 / jnp.sqrt(jnp.float32(32))
    params["w5"] = jax.random.uniform(nxt(), (32, 1), jnp.float32, -bound, bound)
    params["b5"] = jax.random.uniform(nxt(), (1,), jnp.float32, -bound, bound)
    return params


def reference_forward(x, params):
    """Pure-JAX f32 reference (eval-mode module semantics) for validation."""
    s0, t0 = _fold_bn(**params["bn0"])
    h = x * s0 + t0
    for li in range(1, 5):
        s, t = _fold_bn(**params[f"bn{li}"])
        h = h @ params[f"w{li}"] + params[f"b{li}"]
        h = jnp.maximum(h * s + t, 0.0)
    z = h @ params["w5"] + params["b5"]
    return 1.0 / (1.0 + jnp.exp(-z))


if __name__ == "__main__":
    key = jax.random.PRNGKey(0)
    kx, kp = jax.random.split(key)

    batch = 40            # small, non-multiple of the tile to exercise padding
    input_size = 32       # number of transaction features
    x = jax.random.normal(kx, (batch, input_size), dtype=jnp.float32)

    params = make_params(input_size, kp)

    # tile_b=16 at this toy batch exercises a multi-step grid + batch padding;
    # for real serving batches use the default tile_b=512 (sweep 256-1024).
    out = fraud_detector_forward(x, params, tile_b=16)
    out = jax.block_until_ready(out)

    ref = reference_forward(x, params)
    assert out.shape == (batch, 1)
    # bf16 matmul inputs (f32 accumulate) -> loosened tolerance vs the f32 reference.
    assert jnp.allclose(out, ref, atol=2e-2, rtol=2e-2), "mismatch vs reference"

    print("KERNEL_OK")
</pallas_src>

<mosaic_0001>
module attributes {stable_mosaic.version = 11 : i64} {
  func.func @fraud_detector_kernel(%arg0: i32, %arg1: memref<16x32xf32, #tpu.memory_space<vmem>>, %arg2: memref<32x256xbf16, #tpu.memory_space<vmem>>, %arg3: memref<1x256xf32, #tpu.memory_space<vmem>>, %arg4: memref<256x128xbf16, #tpu.memory_space<vmem>>, %arg5: memref<1x128xf32, #tpu.memory_space<vmem>>, %arg6: memref<128x64xbf16, #tpu.memory_space<vmem>>, %arg7: memref<1x64xf32, #tpu.memory_space<vmem>>, %arg8: memref<64x32xbf16, #tpu.memory_space<vmem>>, %arg9: memref<1x32xf32, #tpu.memory_space<vmem>>, %arg10: memref<32x128xbf16, #tpu.memory_space<vmem>>, %arg11: memref<1x128xf32, #tpu.memory_space<vmem>>, %arg12: memref<16x128xf32, #tpu.memory_space<vmem>>) attributes {dimension_semantics = [#tpu.dimension_semantics<parallel>], iteration_bounds = array<i64: 3>, scalar_prefetch = 0 : i64, scratch_operands = 0 : i64, tpu.core_type = #tpu.core_type<tc>, window_params = [{transform_indices = @transform_0, window_bounds = array<i64: 16, 32>}, {pipeline_mode = #tpu.pipeline_mode<synchronous>, transform_indices = @transform_1, window_bounds = array<i64: 32, 256>}, {pipeline_mode = #tpu.pipeline_mode<synchronous>, transform_indices = @transform_2, window_bounds = array<i64: 1, 256>}, {pipeline_mode = #tpu.pipeline_mode<synchronous>, transform_indices = @transform_3, window_bounds = array<i64: 256, 128>}, {pipeline_mode = #tpu.pipeline_mode<synchronous>, transform_indices = @transform_4, window_bounds = array<i64: 1, 128>}, {pipeline_mode = #tpu.pipeline_mode<synchronous>, transform_indices = @transform_5, window_bounds = array<i64: 128, 64>}, {pipeline_mode = #tpu.pipeline_mode<synchronous>, transform_indices = @transform_6, window_bounds = array<i64: 1, 64>}, {pipeline_mode = #tpu.pipeline_mode<synchronous>, transform_indices = @transform_7, window_bounds = array<i64: 64, 32>}, {pipeline_mode = #tpu.pipeline_mode<synchronous>, transform_indices = @transform_8, window_bounds = array<i64: 1, 32>}, {pipeline_mode = #tpu.pipeline_mode<synchronous>, transform_indices = @transform_9, window_bounds = array<i64: 32, 128>}, {pipeline_mode = #tpu.pipeline_mode<synchronous>, transform_indices = @transform_10, window_bounds = array<i64: 1, 128>}, {transform_indices = @transform_11, window_bounds = array<i64: 16, 128>}]} {
    %c0 = arith.constant 0 : index
    %c0_0 = arith.constant 0 : index
    %0 = vector.load %arg1[%c0, %c0_0] : memref<16x32xf32, #tpu.memory_space<vmem>>, vector<16x32xf32>
    %1 = arith.truncf %0 : vector<16x32xf32> to vector<16x32xbf16>
    %c0_1 = arith.constant 0 : index
    %c0_2 = arith.constant 0 : index
    %2 = vector.load %arg2[%c0_1, %c0_2] : memref<32x256xbf16, #tpu.memory_space<vmem>>, vector<32x256xbf16>
    %cst = arith.constant dense<0.000000e+00> : vector<16x256xf32>
    %3 = tpu.matmul %1, %2, %cst {dimension_numbers = #tpu.dot_dimension_numbers<[1], [0], [0], [1], [0, 0, 1, 1], [], []>} : vector<16x32xbf16>, vector<32x256xbf16>, vector<16x256xf32> -> vector<16x256xf32>
    %c0_3 = arith.constant 0 : index
    %c0_4 = arith.constant 0 : index
    %4 = vector.load %arg3[%c0_3, %c0_4] : memref<1x256xf32, #tpu.memory_space<vmem>>, vector<1x256xf32>
    %5 = vector.broadcast %4 : vector<1x256xf32> to vector<16x256xf32>
    %6 = arith.addf %3, %5 : vector<16x256xf32>
    %cst_5 = arith.constant 0.000000e+00 : f32
    %7 = vector.broadcast %cst_5 : f32 to vector<16x256xf32>
    %8 = arith.maximumf %6, %7 : vector<16x256xf32>
    %9 = arith.truncf %8 : vector<16x256xf32> to vector<16x256xbf16>
    %c0_6 = arith.constant 0 : index
    %c0_7 = arith.constant 0 : index
    %10 = vector.load %arg4[%c0_6, %c0_7] : memref<256x128xbf16, #tpu.memory_space<vmem>>, vector<256x128xbf16>
    %cst_8 = arith.constant dense<0.000000e+00> : vector<16x128xf32>
    %11 = tpu.matmul %9, %10, %cst_8 {dimension_numbers = #tpu.dot_dimension_numbers<[1], [0], [0], [1], [0, 0, 1, 1], [], []>} : vector<16x256xbf16>, vector<256x128xbf16>, vector<16x128xf32> -> vector<16x128xf32>
    %c0_9 = arith.constant 0 : index
    %c0_10 = arith.constant 0 : index
    %12 = vector.load %arg5[%c0_9, %c0_10] : memref<1x128xf32, #tpu.memory_space<vmem>>, vector<1x128xf32>
    %13 = vector.broadcast %12 : vector<1x128xf32> to vector<16x128xf32>
    %14 = arith.addf %11, %13 : vector<16x128xf32>
    %cst_11 = arith.constant 0.000000e+00 : f32
    %15 = vector.broadcast %cst_11 : f32 to vector<16x128xf32>
    %16 = arith.maximumf %14, %15 : vector<16x128xf32>
    %17 = arith.truncf %16 : vector<16x128xf32> to vector<16x128xbf16>
    %c0_12 = arith.constant 0 : index
    %c0_13 = arith.constant 0 : index
    %18 = vector.load %arg6[%c0_12, %c0_13] : memref<128x64xbf16, #tpu.memory_space<vmem>>, vector<128x64xbf16>
    %cst_14 = arith.constant dense<0.000000e+00> : vector<16x64xf32>
    %19 = tpu.matmul %17, %18, %cst_14 {dimension_numbers = #tpu.dot_dimension_numbers<[1], [0], [0], [1], [0, 0, 1, 1], [], []>} : vector<16x128xbf16>, vector<128x64xbf16>, vector<16x64xf32> -> vector<16x64xf32>
    %c0_15 = arith.constant 0 : index
    %c0_16 = arith.constant 0 : index
    %20 = vector.load %arg7[%c0_15, %c0_16] : memref<1x64xf32, #tpu.memory_space<vmem>>, vector<1x64xf32>
    %21 = vector.broadcast %20 : vector<1x64xf32> to vector<16x64xf32>
    %22 = arith.addf %19, %21 : vector<16x64xf32>
    %cst_17 = arith.constant 0.000000e+00 : f32
    %23 = vector.broadcast %cst_17 : f32 to vector<16x64xf32>
    %24 = arith.maximumf %22, %23 : vector<16x64xf32>
    %25 = arith.truncf %24 : vector<16x64xf32> to vector<16x64xbf16>
    %c0_18 = arith.constant 0 : index
    %c0_19 = arith.constant 0 : index
    %26 = vector.load %arg8[%c0_18, %c0_19] : memref<64x32xbf16, #tpu.memory_space<vmem>>, vector<64x32xbf16>
    %cst_20 = arith.constant dense<0.000000e+00> : vector<16x32xf32>
    %27 = tpu.matmul %25, %26, %cst_20 {dimension_numbers = #tpu.dot_dimension_numbers<[1], [0], [0], [1], [0, 0, 1, 1], [], []>} : vector<16x64xbf16>, vector<64x32xbf16>, vector<16x32xf32> -> vector<16x32xf32>
    %c0_21 = arith.constant 0 : index
    %c0_22 = arith.constant 0 : index
    %28 = vector.load %arg9[%c0_21, %c0_22] : memref<1x32xf32, #tpu.memory_space<vmem>>, vector<1x32xf32>
    %29 = vector.broadcast %28 : vector<1x32xf32> to vector<16x32xf32>
    %30 = arith.addf %27, %29 : vector<16x32xf32>
    %cst_23 = arith.constant 0.000000e+00 : f32
    %31 = vector.broadcast %cst_23 : f32 to vector<16x32xf32>
    %32 = arith.maximumf %30, %31 : vector<16x32xf32>
    %33 = arith.truncf %32 : vector<16x32xf32> to vector<16x32xbf16>
    %c0_24 = arith.constant 0 : index
    %c0_25 = arith.constant 0 : index
    %34 = vector.load %arg10[%c0_24, %c0_25] : memref<32x128xbf16, #tpu.memory_space<vmem>>, vector<32x128xbf16>
    %cst_26 = arith.constant dense<0.000000e+00> : vector<16x128xf32>
    %35 = tpu.matmul %33, %34, %cst_26 {dimension_numbers = #tpu.dot_dimension_numbers<[1], [0], [0], [1], [0, 0, 1, 1], [], []>} : vector<16x32xbf16>, vector<32x128xbf16>, vector<16x128xf32> -> vector<16x128xf32>
    %c0_27 = arith.constant 0 : index
    %c0_28 = arith.constant 0 : index
    %36 = vector.load %arg11[%c0_27, %c0_28] : memref<1x128xf32, #tpu.memory_space<vmem>>, vector<1x128xf32>
    %37 = vector.broadcast %36 : vector<1x128xf32> to vector<16x128xf32>
    %38 = arith.addf %35, %37 : vector<16x128xf32>
    %cst_29 = arith.constant 0.000000e+00 : f32
    %39 = vector.broadcast %cst_29 : f32 to vector<16x128xf32>
    %40 = arith.subf %39, %38 : vector<16x128xf32>
    %41 = math.exp %40 : vector<16x128xf32>
    %cst_30 = arith.constant 1.000000e+00 : f32
    %42 = vector.broadcast %cst_30 : f32 to vector<16x128xf32>
    %43 = arith.addf %42, %41 : vector<16x128xf32>
    %44 = tpu.reciprocal %43 {approx = true} : vector<16x128xf32> -> vector<16x128xf32>
    %c0_31 = arith.constant 0 : index
    %c0_32 = arith.constant 0 : index
    %45 = vector.load %arg12[%c0_31, %c0_32] : memref<16x128xf32, #tpu.memory_space<vmem>>, vector<16x128xf32>
    tpu.vector_store %arg12[%c0_31, %c0_32], %44 {strides = array<i32>} : memref<16x128xf32, #tpu.memory_space<vmem>>, vector<16x128xf32>,
    return
  }
  func.func @transform_0(%arg0: i32) -> (i32, i32) {
    %c0_i32 = arith.constant 0 : i32
    %c0_i32_0 = arith.constant 0 : i32
    return %arg0, %c0_i32 : i32, i32
  }
  func.func @transform_1(%arg0: i32) -> (i32, i32) {
    %c0_i32 = arith.constant 0 : i32
    %c0_i32_0 = arith.constant 0 : i32
    %c0_i32_1 = arith.constant 0 : i32
    return %c0_i32, %c0_i32_0 : i32, i32
  }
  func.func @transform_2(%arg0: i32) -> (i32, i32) {
    %c0_i32 = arith.constant 0 : i32
    %c0_i32_0 = arith.constant 0 : i32
    %c0_i32_1 = arith.constant 0 : i32
    return %c0_i32, %c0_i32_0 : i32, i32
  }
  func.func @transform_3(%arg0: i32) -> (i32, i32) {
    %c0_i32 = arith.constant 0 : i32
    %c0_i32_0 = arith.constant 0 : i32
    %c0_i32_1 = arith.constant 0 : i32
    return %c0_i32, %c0_i32_0 : i32, i32
  }
  func.func @transform_4(%arg0: i32) -> (i32, i32) {
    %c0_i32 = arith.constant 0 : i32
    %c0_i32_0 = arith.constant 0 : i32
    %c0_i32_1 = arith.constant 0 : i32
    return %c0_i32, %c0_i32_0 : i32, i32
  }
  func.func @transform_5(%arg0: i32) -> (i32, i32) {
    %c0_i32 = arith.constant 0 : i32
    %c0_i32_0 = arith.constant 0 : i32
    %c0_i32_1 = arith.constant 0 : i32
    return %c0_i32, %c0_i32_0 : i32, i32
  }
  func.func @transform_6(%arg0: i32) -> (i32, i32) {
    %c0_i32 = arith.constant 0 : i32
    %c0_i32_0 = arith.constant 0 : i32
    %c0_i32_1 = arith.constant 0 : i32
    return %c0_i32, %c0_i32_0 : i32, i32
  }
  func.func @transform_7(%arg0: i32) -> (i32, i32) {
    %c0_i32 = arith.constant 0 : i32
    %c0_i32_0 = arith.constant 0 : i32
    %c0_i32_1 = arith.constant 0 : i32
    return %c0_i32, %c0_i32_0 : i32, i32
  }
  func.func @transform_8(%arg0: i32) -> (i32, i32) {
    %c0_i32 = arith.constant 0 : i32
    %c0_i32_0 = arith.constant 0 : i32
    %c0_i32_1 = arith.constant 0 : i32
    return %c0_i32, %c0_i32_0 : i32, i32
  }
  func.func @transform_9(%arg0: i32) -> (i32, i32) {
    %c0_i32 = arith.constant 0 : i32
    %c0_i32_0 = arith.constant 0 : i32
    %c0_i32_1 = arith.constant 0 : i32
    return %c0_i32, %c0_i32_0 : i32, i32
  }
  func.func @transform_10(%arg0: i32) -> (i32, i32) {
    %c0_i32 = arith.constant 0 : i32
    %c0_i32_0 = arith.constant 0 : i32
    %c0_i32_1 = arith.constant 0 : i32
    return %c0_i32, %c0_i32_0 : i32, i32
  }
  func.func @transform_11(%arg0: i32) -> (i32, i32) {
    %c0_i32 = arith.constant 0 : i32
    %c0_i32_0 = arith.constant 0 : i32
    return %arg0, %c0_i32 : i32, i32
  }
}

</mosaic_0001>

<llo_original>
// kernel: tpu_custom_call.1
$region0: #{tpu_custom_call.1}
  #allocation0 [shape = 'u32[]', space=smem, size = 0x4, offset = 0x4, fixed_abs, tag = 'smem constant byte address 0x4 - core index']
  #allocation1 [shape = 'u32[144,128]{1,0:T(1,128)}', space=vmem, size = 0x12000, scoped, tag = 'internal scratch']
  %s0 = inlined_call_operand.vmem [shape: f32[48,32], index: 0, kind: input, shape index: {}]
  %s1 = inlined_call_operand.vmem [shape: bf16[32,256], index: 1, kind: input, shape index: {}]
  %s2 = inlined_call_operand.vmem [shape: f32[1,256], index: 2, kind: input, shape index: {}]
  %s3 = inlined_call_operand.vmem [shape: bf16[256,128], index: 3, kind: input, shape index: {}]
  %s4 = inlined_call_operand.vmem [shape: f32[1,128], index: 4, kind: input, shape index: {}]
  %s5 = inlined_call_operand.vmem [shape: bf16[128,64], index: 5, kind: input, shape index: {}]
  %s6 = inlined_call_operand.vmem [shape: f32[1,64], index: 6, kind: input, shape index: {}]
  %s7 = inlined_call_operand.vmem [shape: bf16[64,32], index: 7, kind: input, shape index: {}]
  %s8 = inlined_call_operand.vmem [shape: f32[1,32], index: 8, kind: input, shape index: {}]
  %s9 = inlined_call_operand.vmem [shape: bf16[32,128], index: 9, kind: input, shape index: {}]
  %s10 = inlined_call_operand.vmem [shape: f32[1,128], index: 10, kind: input, shape index: {}]
  %s11 = inlined_call_operand.hbm [shape: f32[48,128], index: 11, kind: output, shape index: {}]
  %s12 = sld [smem:[#allocation0]]
  $region77: #{tpu_custom_call.1} parent=0
    _
  %s14 = ssub.s32 1, %s12
  %s15 = scalar_select 0, %s14, %s12
  $region1: #{tpu_custom_call.1} parent=0
    #allocation2 [shape = 'u8[16384]{0}', space=vmem, size = 0x4000, scoped, tag = 'output window, operand 0']
    #allocation3 [shape = 's32[2]{0}', space=sflag, size = 0x8, scoped, tag = 'scoped memory for tpu_custom_call.1']
    %16 = vsyncpa [#allocation3], 0
    %s17 = scalar_lea.sflag [#allocation3], 1
    %18 = vsyncpa %s17, 0
    loop: start=0, step=1, limit=5
    $region2: #{tpu_custom_call.1} parent=1 // loop_pre_header
      _
    $region3: #{tpu_custom_call.1} parent=1 // loop_header
      %s20 = sphi 0, %s24
      %p21 = scmp.ge.s32.totalorder %s20, 5
      %s30 = sphi 0, %s32
      %s33 = sphi 0, %s30
      %s34 = sphi 0, %s33
      %s50 = sphi 0, %s34
      %s54 = sphi 0, %s54
      %s56 = sphi 0, %s54
      %s57 = sphi 0, %s56
      %s71 = sphi 0, %s57
      %s75 = sphi 0, %s75
      %s77 = sphi 0, %s75
      %s78 = sphi 0, %s77
      %s92 = sphi 0, %s78
      %s96 = sphi 0, %s96
      %s98 = sphi 0, %s96
      %s99 = sphi 0, %s98
      %s113 = sphi 0, %s99
      %s117 = sphi 0, %s117
      %s119 = sphi 0, %s117
      %s120 = sphi 0, %s119
      %s134 = sphi 0, %s120
      %s138 = sphi 0, %s138
      %s140 = sphi 0, %s138
      %s141 = sphi 0, %s140
      %s155 = sphi 0, %s141
      %s159 = sphi 0, %s159
      %s161 = sphi 0, %s159
      %s162 = sphi 0, %s161
      %s176 = sphi 0, %s162
      %s180 = sphi 0, %s180
      %s182 = sphi 0, %s180
      %s183 = sphi 0, %s182
      %s197 = sphi 0, %s183
      %s201 = sphi 0, %s201
      %s203 = sphi 0, %s201
      %s204 = sphi 0, %s203
      %s218 = sphi 0, %s204
      %s222 = sphi 0, %s222
      %s224 = sphi 0, %s222
      %s225 = sphi 0, %s224
      %s239 = sphi 0, %s225
      %s243 = sphi 0, %s243
      %s245 = sphi 0, %s243
      %s246 = sphi 0, %s245
      %s260 = sphi 0, %s246
      %s266 = sphi 0, %s268
      %s269 = sphi 0, %s266
      %s270 = sphi 0, %s269
      %s286 = sphi 0, %s270
    $region4: #{tpu_custom_call.1} parent=1 // loop_header_branch
      %23 = sbr.rel (%p21) target = $region8
    $region5: #{tpu_custom_call.1} parent=1 // loop_body
      %s25 = ssub.s32 %s20, 1
      %s26 = ssub.s32 %s20, 2
      %s27 = sadd.s32 %s20, 1
      %s28 = ssub.s32 %s20, %s27
      %p29 = scmp.eq.s32.totalorder %s28, 0
      %s31 = sadd.s32 %s30, 1
      %s32 = scalar_select %p29, %s30, %s31
      %p35 = pneg %p29
      %p36 = scmp.eq.s32.totalorder %s20, 2
      %p37 = por %p35, %p36
      %p38 = scmp.ne.s32.totalorder %s30, %s33
      %p39 = scmp.eq.s32.totalorder %s20, 0
      %p40 = por %p38, %p39
      %p41 = scmp.ne.s32.totalorder %s30, %s33
      %p42 = scmp.eq.s32.totalorder %s25, 2
      %p43 = por %p41, %p42
      %p44 = scmp.ne.s32.totalorder %s33, %s34
      %p45 = scmp.eq.s32.totalorder %s25, 0
      %p46 = por %p44, %p45
      %p47 = scmp.ne.s32.totalorder %s33, %s34
      %p48 = scmp.eq.s32.totalorder %s26, 2
      %p49 = por %p47, %p48
      %p51 = scmp.ne.s32.totalorder %s34, %s50
      %p52 = scmp.eq.s32.totalorder %s26, 0
      %p53 = por %p51, %p52
      %s55 = sadd.s32 %s54, 1
      %p58 = scmp.eq.s32.totalorder %s20, 2
      %p59 = scmp.ne.s32.totalorder %s54, %s56
      %p60 = scmp.eq.s32.totalorder %s20, 0
      %p61 = por %p59, %p60
      %p62 = scmp.ne.s32.totalorder %s54, %s56
      %p63 = scmp.eq.s32.totalorder %s25, 2
      %p64 = por %p62, %p63
      %p65 = scmp.ne.s32.totalorder %s56, %s57
      %p66 = scmp.eq.s32.totalorder %s25, 0
      %p67 = por %p65, %p66
      %p68 = scmp.ne.s32.totalorder %s56, %s57
      %p69 = scmp.eq.s32.totalorder %s26, 2
      %p70 = por %p68, %p69
      %p72 = scmp.ne.s32.totalorder %s57, %s71
      %p73 = scmp.eq.s32.totalorder %s26, 0
      %p74 = por %p72, %p73
      %s76 = sadd.s32 %s75, 1
      %p79 = scmp.eq.s32.totalorder %s20, 2
      %p80 = scmp.ne.s32.totalorder %s75, %s77
      %p81 = scmp.eq.s32.totalorder %s20, 0
      %p82 = por %p80, %p81
      %p83 = scmp.ne.s32.totalorder %s75, %s77
      %p84 = scmp.eq.s32.totalorder %s25, 2
      %p85 = por %p83, %p84
      %p86 = scmp.ne.s32.totalorder %s77, %s78
      %p87 = scmp.eq.s32.totalorder %s25, 0
      %p88 = por %p86, %p87
      %p89 = scmp.ne.s32.totalorder %s77, %s78
      %p90 = scmp.eq.s32.totalorder %s26, 2
      %p91 = por %p89, %p90
      %p93 = scmp.ne.s32.totalorder %s78, %s92
      %p94 = scmp.eq.s32.totalorder %s26, 0
      %p95 = por %p93, %p94
      %s97 = sadd.s32 %s96, 1
      %p100 = scmp.eq.s32.totalorder %s20, 2
      %p101 = scmp.ne.s32.totalorder %s96, %s98
      %p102 = scmp.eq.s32.totalorder %s20, 0
      %p103 = por %p101, %p102
      %p104 = scmp.ne.s32.totalorder %s96, %s98
      %p105 = scmp.eq.s32.totalorder %s25, 2
      %p106 = por %p104, %p105
      %p107 = scmp.ne.s32.totalorder %s98, %s99
      %p108 = scmp.eq.s32.totalorder %s25, 0
      %p109 = por %p107, %p108
      %p110 = scmp.ne.s32.totalorder %s98, %s99
      %p111 = scmp.eq.s32.totalorder %s26, 2
      %p112 = por %p110, %p111
      %p114 = scmp.ne.s32.totalorder %s99, %s113
      %p115 = scmp.eq.s32.totalorder %s26, 0
      %p116 = por %p114, %p115
      %s118 = sadd.s32 %s117, 1
      %p121 = scmp.eq.s32.totalorder %s20, 2
      %p122 = scmp.ne.s32.totalorder %s117, %s119
      %p123 = scmp.eq.s32.totalorder %s20, 0
      %p124 = por %p122, %p123
      %p125 = scmp.ne.s32.totalorder %s117, %s119
      %p126 = scmp.eq.s32.totalorder %s25, 2
      %p127 = por %p125, %p126
      %p128 = scmp.ne.s32.totalorder %s119, %s120
      %p129 = scmp.eq.s32.totalorder %s25, 0
      %p130 = por %p128, %p129
      %p131 = scmp.ne.s32.totalorder %s119, %s120
      %p132 = scmp.eq.s32.totalorder %s26, 2
      %p133 = por %p131, %p132
      %p135 = scmp.ne.s32.totalorder %s120, %s134
      %p136 = scmp.eq.s32.totalorder %s26, 0
      %p137 = por %p135, %p136
      %s139 = sadd.s32 %s138, 1
      %p142 = scmp.eq.s32.totalorder %s20, 2
      %p143 = scmp.ne.s32.totalorder %s138, %s140
      %p144 = scmp.eq.s32.totalorder %s20, 0
      %p145 = por %p143, %p144
      %p146 = scmp.ne.s32.totalorder %s138, %s140
      %p147 = scmp.eq.s32.totalorder %s25, 2
      %p148 = por %p146, %p147
      %p149 = scmp.ne.s32.totalorder %s140, %s141
      %p150 = scmp.eq.s32.totalorder %s25, 0
      %p151 = por %p149, %p150
      %p152 = scmp.ne.s32.totalorder %s140, %s141
      %p153 = scmp.eq.s32.totalorder %s26, 2
      %p154 = por %p152, %p153
      %p156 = scmp.ne.s32.totalorder %s141, %s155
      %p157 = scmp.eq.s32.totalorder %s26, 0
      %p158 = por %p156, %p157
      %s160 = sadd.s32 %s159, 1
      %p163 = scmp.eq.s32.totalorder %s20, 2
      %p164 = scmp.ne.s32.totalorder %s159, %s161
      %p165 = scmp.eq.s32.totalorder %s20, 0
      %p166 = por %p164, %p165
      %p167 = scmp.ne.s32.totalorder %s159, %s161
      %p168 = scmp.eq.s32.totalorder %s25, 2
      %p169 = por %p167, %p168
      %p170 = scmp.ne.s32.totalorder %s161, %s162
      %p171 = scmp.eq.s32.totalorder %s25, 0
      %p172 = por %p170, %p171
      %p173 = scmp.ne.s32.totalorder %s161, %s162
      %p174 = scmp.eq.s32.totalorder %s26, 2
      %p175 = por %p173, %p174
      %p177 = scmp.ne.s32.totalorder %s162, %s176
      %p178 = scmp.eq.s32.totalorder %s26, 0
      %p179 = por %p177, %p178
      %s181 = sadd.s32 %s180, 1
      %p184 = scmp.eq.s32.totalorder %s20, 2
      %p185 = scmp.ne.s32.totalorder %s180, %s182
      %p186 = scmp.eq.s32.totalorder %s20, 0
      %p187 = por %p185, %p186
      %p188 = scmp.ne.s32.totalorder %s180, %s182
      %p189 = scmp.eq.s32.totalorder %s25, 2
      %p190 = por %p188, %p189
      %p191 = scmp.ne.s32.totalorder %s182, %s183
      %p192 = scmp.eq.s32.totalorder %s25, 0
      %p193 = por %p191, %p192
      %p194 = scmp.ne.s32.totalorder %s182, %s183
      %p195 = scmp.eq.s32.totalorder %s26, 2
      %p196 = por %p194, %p195
      %p198 = scmp.ne.s32.totalorder %s183, %s197
      %p199 = scmp.eq.s32.totalorder %s26, 0
      %p200 = por %p198, %p199
      %s202 = sadd.s32 %s201, 1
      %p205 = scmp.eq.s32.totalorder %s20, 2
      %p206 = scmp.ne.s32.totalorder %s201, %s203
      %p207 = scmp.eq.s32.totalorder %s20, 0
      %p208 = por %p206, %p207
      %p209 = scmp.ne.s32.totalorder %s201, %s203
      %p210 = scmp.eq.s32.totalorder %s25, 2
      %p211 = por %p209, %p210
      %p212 = scmp.ne.s32.totalorder %s203, %s204
      %p213 = scmp.eq.s32.totalorder %s25, 0
      %p214 = por %p212, %p213
      %p215 = scmp.ne.s32.totalorder %s203, %s204
      %p216 = scmp.eq.s32.totalorder %s26, 2
      %p217 = por %p215, %p216
      %p219 = scmp.ne.s32.totalorder %s204, %s218
      %p220 = scmp.eq.s32.totalorder %s26, 0
      %p221 = por %p219, %p220
      %s223 = sadd.s32 %s222, 1
      %p226 = scmp.eq.s32.totalorder %s20, 2
      %p227 = scmp.ne.s32.totalorder %s222, %s224
      %p228 = scmp.eq.s32.totalorder %s20, 0
      %p229 = por %p227, %p228
      %p230 = scmp.ne.s32.totalorder %s222, %s224
      %p231 = scmp.eq.s32.totalorder %s25, 2
      %p232 = por %p230, %p231
      %p233 = scmp.ne.s32.totalorder %s224, %s225
      %p234 = scmp.eq.s32.totalorder %s25, 0
      %p235 = por %p233, %p234
      %p236 = scmp.ne.s32.totalorder %s224, %s225
      %p237 = scmp.eq.s32.totalorder %s26, 2
      %p238 = por %p236, %p237
      %p240 = scmp.ne.s32.totalorder %s225, %s239
      %p241 = scmp.eq.s32.totalorder %s26, 0
      %p242 = por %p240, %p241
      %s244 = sadd.s32 %s243, 1
      %p247 = scmp.eq.s32.totalorder %s20, 2
      %p248 = scmp.ne.s32.totalorder %s243, %s245
      %p249 = scmp.eq.s32.totalorder %s20, 0
      %p250 = por %p248, %p249
      %p251 = scmp.ne.s32.totalorder %s243, %s245
      %p252 = scmp.eq.s32.totalorder %s25, 2
      %p253 = por %p251, %p252
      %p254 = scmp.ne.s32.totalorder %s245, %s246
      %p255 = scmp.eq.s32.totalorder %s25, 0
      %p256 = por %p254, %p255
      %p257 = scmp.ne.s32.totalorder %s245, %s246
      %p258 = scmp.eq.s32.totalorder %s26, 2
      %p259 = por %p257, %p258
      %p261 = scmp.ne.s32.totalorder %s246, %s260
      %p262 = scmp.eq.s32.totalorder %s26, 0
      %p263 = por %p261, %p262
      %s264 = ssub.s32 %s20, %s27
      %p265 = scmp.eq.s32.totalorder %s264, 0
      %s267 = sadd.s32 %s266, 1
      %s268 = scalar_select %p265, %s266, %s267
      %p271 = pneg %p265
      %p272 = scmp.eq.s32.totalorder %s20, 2
      %p273 = por %p271, %p272
      %p274 = scmp.ne.s32.totalorder %s266, %s269
      %p275 = scmp.eq.s32.totalorder %s20, 0
      %p276 = por %p274, %p275
      %p277 = scmp.ne.s32.totalorder %s266, %s269
      %p278 = scmp.eq.s32.totalorder %s25, 2
      %p279 = por %p277, %p278
      %p280 = scmp.ne.s32.totalorder %s269, %s270
      %p281 = scmp.eq.s32.totalorder %s25, 0
      %p282 = por %p280, %p281
      %p283 = scmp.ne.s32.totalorder %s269, %s270
      %p284 = scmp.eq.s32.totalorder %s26, 2
      %p285 = por %p283, %p284
      %p287 = scmp.ne.s32.totalorder %s270, %s286
      %p288 = scmp.eq.s32.totalorder %s26, 0
      %p289 = por %p287, %p288
      %p290 = scmp.le.s32.totalorder 1, %s20
      %p291 = scmp.lt.s32.totalorder %s20, 4
      %p292 = pnand %p290, %p291
      %p293 = pneg %p292
      // Predicated region
      $region9: #{tpu_custom_call.1} parent=5 // pred_check
        _
      $region10: #{tpu_custom_call.1} parent=5 // pred_check_branch
        %295 = sbr.rel (%p292) target = $region12
      $region11: #{tpu_custom_call.1} parent=5 // pred_region
        %s296 = ssub.s32 %s20, 1
        // Predicated region
        $region13: #{tpu_custom_call.1} parent=11 // pred_check
          %p297 = pneg %p67
        $region14: #{tpu_custom_call.1} parent=11 // pred_check_branch
          %299 = sbr.rel (%p297) target = $region16
        $region15: #{tpu_custom_call.1} parent=11 // pred_region
          _
        $region16: #{tpu_custom_call.1} parent=11 // pred_fallthru
          _
        // Predicated region
        $region17: #{tpu_custom_call.1} parent=11 // pred_check
          %p300 = pneg %p88
        $region18: #{tpu_custom_call.1} parent=11 // pred_check_branch
          %302 = sbr.rel (%p300) target = $region20
        $region19: #{tpu_custom_call.1} parent=11 // pred_region
          _
        $region20: #{tpu_custom_call.1} parent=11 // pred_fallthru
          _
        // Predicated region
        $region21: #{tpu_custom_call.1} parent=11 // pred_check
          %p303 = pneg %p109
        $region22: #{tpu_custom_call.1} parent=11 // pred_check_branch
          %305 = sbr.rel (%p303) target = $region24
        $region23: #{tpu_custom_call.1} parent=11 // pred_region
          _
        $region24: #{tpu_custom_call.1} parent=11 // pred_fallthru
          _
        // Predicated region
        $region25: #{tpu_custom_call.1} parent=11 // pred_check
          %p306 = pneg %p130
        $region26: #{tpu_custom_call.1} parent=11 // pred_check_branch
          %308 = sbr.rel (%p306) target = $region28
        $region27: #{tpu_custom_call.1} parent=11 // pred_region
          _
        $region28: #{tpu_custom_call.1} parent=11 // pred_fallthru
          _
        // Predicated region
        $region29: #{tpu_custom_call.1} parent=11 // pred_check
          %p309 = pneg %p151
        $region30: #{tpu_custom_call.1} parent=11 // pred_check_branch
          %311 = sbr.rel (%p309) target = $region32
        $region31: #{tpu_custom_call.1} parent=11 // pred_region
          _
        $region32: #{tpu_custom_call.1} parent=11 // pred_fallthru
          _
        // Predicated region
        $region33: #{tpu_custom_call.1} parent=11 // pred_check
          %p312 = pneg %p172
        $region34: #{tpu_custom_call.1} parent=11 // pred_check_branch
          %314 = sbr.rel (%p312) target = $region36
        $region35: #{tpu_custom_call.1} parent=11 // pred_region
          _
        $region36: #{tpu_custom_call.1} parent=11 // pred_fallthru
          _
        // Predicated region
        $region37: #{tpu_custom_call.1} parent=11 // pred_check
          %p315 = pneg %p193
        $region38: #{tpu_custom_call.1} parent=11 // pred_check_branch
          %317 = sbr.rel (%p315) target = $region40
        $region39: #{tpu_custom_call.1} parent=11 // pred_region
          _
        $region40: #{tpu_custom_call.1} parent=11 // pred_fallthru
          _
        // Predicated region
        $region41: #{tpu_custom_call.1} parent=11 // pred_check
          %p318 = pneg %p214
        $region42: #{tpu_custom_call.1} parent=11 // pred_check_branch
          %320 = sbr.rel (%p318) target = $region44
        $region43: #{tpu_custom_call.1} parent=11 // pred_region
          _
        $region44: #{tpu_custom_call.1} parent=11 // pred_fallthru
          _
        // Predicated region
        $region45: #{tpu_custom_call.1} parent=11 // pred_check
          %p321 = pneg %p235
        $region46: #{tpu_custom_call.1} parent=11 // pred_check_branch
          %323 = sbr.rel (%p321) target = $region48
        $region47: #{tpu_custom_call.1} parent=11 // pred_region
          _
        $region48: #{tpu_custom_call.1} parent=11 // pred_fallthru
          _
        // Predicated region
        $region49: #{tpu_custom_call.1} parent=11 // pred_check
          %p324 = pneg %p256
        $region50: #{tpu_custom_call.1} parent=11 // pred_check_branch
          %326 = sbr.rel (%p324) target = $region52
        $region51: #{tpu_custom_call.1} parent=11 // pred_region
          _
        $region52: #{tpu_custom_call.1} parent=11 // pred_fallthru
          _
      $region12: #{tpu_custom_call.1} parent=5 // pred_fallthru
        _
      %p327 = scmp.lt.s32.totalorder %s20, 3
      // Predicated region
      $region53: #{tpu_custom_call.1} parent=5 // pred_check
        %p328 = pneg %p327
      $region54: #{tpu_custom_call.1} parent=5 // pred_check_branch
        %330 = sbr.rel (%p328) target = $region56
      $region55: #{tpu_custom_call.1} parent=5 // pred_region
        // Predicated region
        $region57: #{tpu_custom_call.1} parent=55 // pred_check
          %p331 = pneg %p40
        $region58: #{tpu_custom_call.1} parent=55 // pred_check_branch
          %333 = sbr.rel (%p331) target = $region60
        $region59: #{tpu_custom_call.1} parent=55 // pred_region
          %s334 = smul.u32 2, %s20
          %p335 = scmp.lt.s32.totalorder %s334, 5
          %s336 = scalar_select %p335, %s334, 5
          %s337 = smul.addr %s336, 8
          %s338 = scalar_lea.vmem %s0, %s337
          %s339 = smul.u32 2, %s20
        $region60: #{tpu_custom_call.1} parent=55 // pred_fallthru
          _
      $region56: #{tpu_custom_call.1} parent=5 // pred_fallthru
        _
      %p340 = scmp.le.s32.totalorder 1, %s20
      %p341 = scmp.lt.s32.totalorder %s20, 4
      %p342 = pnand %p340, %p341
      %p343 = pneg %p342
      // Predicated region
      $region61: #{tpu_custom_call.1} parent=5 // pred_check
        _
      $region62: #{tpu_custom_call.1} parent=5 // pred_check_branch
        %345 = sbr.rel (%p342) target = $region64
      $region63: #{tpu_custom_call.1} parent=5 // pred_region
        %s346 = ssub.s32 %s20, 1
        %s347 = smul.u32 2, %s25
        %p348 = scmp.lt.s32.totalorder %s347, 5
        %s349 = scalar_select %p348, %s347, 5
        %s350 = smul.addr %s349, 8
        %s351 = scalar_lea.vmem %s0, %s350
        %p352 = pneg %p46
        %p353 = pneg %p43
        %p354 = pneg %p67
        %p355 = pneg %p64
        %p356 = pneg %p88
        %p357 = pneg %p85
        %p358 = pneg %p109
        %p359 = pneg %p106
        %p360 = pneg %p130
        %p361 = pneg %p127
        %p362 = pneg %p151
        %p363 = pneg %p148
        %p364 = pneg %p172
        %p365 = pneg %p169
        %p366 = pneg %p193
        %p367 = pneg %p190
        %p368 = pneg %p214
        %p369 = pneg %p211
        %p370 = pneg %p235
        %p371 = pneg %p232
        %p372 = pneg %p256
        %p373 = pneg %p253
        %p374 = pneg %p282
        %p375 = pneg %p279
        %s376 = sand.u32 %s269, 1
        %s377 = scalar_lea.sflag [#allocation3], %s376
        %s378 = sand.u32 %s269, 1
        %s379 = smul.addr %s378, 16
        %s380 = scalar_lea.vmem [#allocation2], %s379
        %s381 = smul.u32 2, %s25
        %p382 = scmp.lt.s32.totalorder %s381, 5
        %s383 = scalar_select %p382, %s381, 5
        %s384 = smul.addr %s383, 8
        %s385 = scalar_lea.vmem %s0, %s384
        %s386 = smul.u32 2, %s25
        %s387 = smul.u32 2, %s25
        %v389 = vld [vmem:[%s385] sm:$0xff]
        %v390 = vld [vmem:[%s385 + $0x8] sm:$0xff]
        %v391 = vpack.c.bf16 %v390, %v389
        %v392 = vld [vmem:[%s1] sm:$0xff]
        %v393 = vld [vmem:[%s1 + $0x8] sm:$0xff]
        %v394 = vld [vmem:[%s1 + $0x10] sm:$0xff]
        %v395 = vld [vmem:[%s1 + $0x18] sm:$0xff]
        %v396 = vld [vmem:[%s2] sm:$0x3]
        %v398 = vlaneseq
        %v399 = vshrl.u32 %v398, 7
        %v400 = vsub.s32 0, %v399
        %v401 = vrot.slane %v396, %v400
        %v402 = vlaneseq
        %v403 = vshrl.u32 %v402, 7
        %v404 = vsub.s32 1, %v403
        %v405 = vrot.slane %v396, %v404
        %v412 = vunpack.c.l.b16 %v392
        %v413 = vunpack.c.h.b16 %v392
        %v414 = vunpack.c.l.b16 %v393
        %v415 = vunpack.c.h.b16 %v393
        %v416 = vunpack.c.l.b16 %v394
        %v417 = vunpack.c.h.b16 %v394
        %v418 = vunpack.c.l.b16 %v395
        %v419 = vunpack.c.h.b16 %v395
        %v420 = vpack.c.b16 %v414, %v412
        %v421 = vpack.c.b16 %v415, %v413
        %v422 = vpack.c.b16 %v418, %v416
        %v423 = vpack.c.b16 %v419, %v417
        %vm428 = vcmask 261120
        %v430 = vsel %vm428, %v391, 0
        %432 = vmatprep.subr.bf16.mxu0 %v421
        %433 = vmatpush1.bf16.msra.mxu0 %v420
        %434 = vmatprep.subr.bf16.mxu0 %v423
        %435 = vmatpush1.bf16.msra.mxu0 %v422
        %436 = vmatprep.subr.bf16.mxu0 0
        %437 = vmatpush1.bf16.msra.mxu0 0
        %438 = vmatprep.subr.bf16.mxu0 0
        %439 = vmatpush1.bf16.msra.mxu0 0
        %440 = vmatprep.subr.bf16.mxu0 0
        %441 = vmatpush1.bf16.msra.mxu0 0
        %442 = vmatprep.subr.bf16.mxu0 0
        %443 = vmatpush1.bf16.msra.mxu0 0
        %444 = vmatprep.subr.bf16.mxu0 0
        %445 = vmatpush1.bf16.msra.mxu0 0
        %446 = vmatprep.subr.bf16.mxu0 0
        %447 = vmatpush1.bf16.msra.mxu0 0
        %448 = vmatprep.subr.bf16.mxu0 0
        %449 = vmatpush1.bf16.msra.mxu0 0
        %450 = vmatprep.subr.bf16.mxu0 0
        %451 = vmatpush1.bf16.msra.mxu0 0
        %452 = vmatprep.subr.bf16.mxu0 0
        %453 = vmatpush1.bf16.msra.mxu0 0
        %454 = vmatprep.subr.bf16.mxu0 0
        %455 = vmatpush1.bf16.msra.mxu0 0
        %456 = vmatprep.subr.bf16.mxu0 0
        %457 = vmatpush1.bf16.msra.mxu0 0
        %458 = vmatprep.subr.bf16.mxu0 0
        %459 = vmatpush1.bf16.msra.mxu0 0
        %460 = vmatprep.subr.bf16.mxu0 0
        %461 = vmatpush1.bf16.msra.mxu0 0
        %462 = vmatprep.subr.bf16.mxu0 0
        %463 = vmatpush1.bf16.msra.mxu0 0
        %464 = vmatprep.mubr.bf16.mxu0 0
        %465 = vmatmul.mubr.bf16.gmra.mrb[0].mxu0 %v430
        %v466 = vpop.f32.mrb[0].mxu0
        %v467 = vadd.f32 %v401, %v466
        %v468 = vpop.f32.mrb[0].mxu0
        %v469 = vadd.f32 %v405, %v468
        %v470 = vpop.f32.mrb[0].mxu0
        %v471 = vadd.f32 %v401, %v470
        %v472 = vpop.f32.mrb[0].mxu0
        %v473 = vadd.f32 %v405, %v472
        %474 = vdwg.mxu0
        %v475 = vmax.f32 %v467, 0.0
        %v476 = vmax.f32 %v469, 0.0
        %v477 = vmax.f32 %v471, 0.0
        %v478 = vmax.f32 %v473, 0.0
        %v479 = vpack.c.bf16 %v477, %v475
        %v480 = vpack.c.bf16 %v478, %v476
        %v481 = vld [vmem:[%s3] sm:$0xf]
        %v482 = vld [vmem:[%s3 + $0x4] sm:$0xf]
        %v483 = vld [vmem:[%s3 + $0x8] sm:$0xf]
        %v484 = vld [vmem:[%s3 + $0xc] sm:$0xf]
        %v485 = vld [vmem:[%s3 + $0x10] sm:$0xf]
        %v486 = vld [vmem:[%s3 + $0x14] sm:$0xf]
        %v487 = vld [vmem:[%s3 + $0x18] sm:$0xf]
        %v488 = vld [vmem:[%s3 + $0x1c] sm:$0xf]
        %v489 = vld [vmem:[%s3 + $0x20] sm:$0xf]
        %v490 = vld [vmem:[%s3 + $0x24] sm:$0xf]
        %v491 = vld [vmem:[%s3 + $0x28] sm:$0xf]
        %v492 = vld [vmem:[%s3 + $0x2c] sm:$0xf]
        %v493 = vld [vmem:[%s3 + $0x30] sm:$0xf]
        %v494 = vld [vmem:[%s3 + $0x34] sm:$0xf]
        %v495 = vld [vmem:[%s3 + $0x38] sm:$0xf]
        %v496 = vld [vmem:[%s3 + $0x3c] sm:$0xf]
        %v497 = vld [vmem:[%s3 + $0x40] sm:$0xf]
        %v498 = vld [vmem:[%s3 + $0x44] sm:$0xf]
        %v499 = vld [vmem:[%s3 + $0x48] sm:$0xf]
        %v500 = vld [vmem:[%s3 + $0x4c] sm:$0xf]
        %v501 = vld [vmem:[%s3 + $0x50] sm:$0xf]
        %v502 = vld [vmem:[%s3 + $0x54] sm:$0xf]
        %v503 = vld [vmem:[%s3 + $0x58] sm:$0xf]
        %v504 = vld [vmem:[%s3 + $0x5c] sm:$0xf]
        %v505 = vld [vmem:[%s3 + $0x60] sm:$0xf]
        %v506 = vld [vmem:[%s3 + $0x64] sm:$0xf]
        %v507 = vld [vmem:[%s3 + $0x68] sm:$0xf]
        %v508 = vld [vmem:[%s3 + $0x6c] sm:$0xf]
        %v509 = vld [vmem:[%s3 + $0x70] sm:$0xf]
        %v510 = vld [vmem:[%s3 + $0x74] sm:$0xf]
        %v511 = vld [vmem:[%s3 + $0x78] sm:$0xf]
        %v512 = vld [vmem:[%s3 + $0x7c] sm:$0xf]
        %v513 = vld [vmem:[%s4] sm:$0x1]
        %v515 = vlaneseq
        %v516 = vshrl.u32 %v515, 7
        %v517 = vsub.s32 0, %v516
        %v518 = vrot.slane %v513, %v517
        %v552 = vunpack.c.l.b16 %v481
        %v553 = vunpack.c.l.b16 %v482
        %v554 = vunpack.c.l.b16 %v483
        %v555 = vunpack.c.l.b16 %v484
        %v556 = vunpack.c.l.b16 %v485
        %v557 = vunpack.c.l.b16 %v486
        %v558 = vunpack.c.l.b16 %v487
        %v559 = vunpack.c.l.b16 %v488
        %v560 = vunpack.c.l.b16 %v489
        %v561 = vunpack.c.l.b16 %v490
        %v562 = vunpack.c.l.b16 %v491
        %v563 = vunpack.c.l.b16 %v492
        %v564 = vunpack.c.l.b16 %v493
        %v565 = vunpack.c.l.b16 %v494
        %v566 = vunpack.c.l.b16 %v495
        %v567 = vunpack.c.l.b16 %v496
        %v568 = vunpack.c.l.b16 %v497
        %v569 = vunpack.c.l.b16 %v498
        %v570 = vunpack.c.l.b16 %v499
        %v571 = vunpack.c.l.b16 %v500
        %v572 = vunpack.c.l.b16 %v501
        %v573 = vunpack.c.l.b16 %v502
        %v574 = vunpack.c.l.b16 %v503
        %v575 = vunpack.c.l.b16 %v504
        %v576 = vunpack.c.l.b16 %v505
        %v577 = vunpack.c.l.b16 %v506
        %v578 = vunpack.c.l.b16 %v507
        %v579 = vunpack.c.l.b16 %v508
        %v580 = vunpack.c.l.b16 %v509
        %v581 = vunpack.c.l.b16 %v510
        %v582 = vunpack.c.l.b16 %v511
        %v583 = vunpack.c.l.b16 %v512
        %v584 = vpack.c.b16 %v553, %v552
        %v585 = vpack.c.b16 %v555, %v554
        %v586 = vpack.c.b16 %v557, %v556
        %v587 = vpack.c.b16 %v559, %v558
        %v588 = vpack.c.b16 %v561, %v560
        %v589 = vpack.c.b16 %v563, %v562
        %v590 = vpack.c.b16 %v565, %v564
        %v591 = vpack.c.b16 %v567, %v566
        %v592 = vpack.c.b16 %v569, %v568
        %v593 = vpack.c.b16 %v571, %v570
        %v594 = vpack.c.b16 %v573, %v572
        %v595 = vpack.c.b16 %v575, %v574
        %v596 = vpack.c.b16 %v577, %v576
        %v597 = vpack.c.b16 %v579, %v578
        %v598 = vpack.c.b16 %v581, %v580
        %v599 = vpack.c.b16 %v583, %v582
        %616 = vmatprep.subr.bf16.mxu0 0
        %617 = vmatpush1.bf16.msra.mxu0 %v584
        %618 = vmatprep.subr.bf16.mxu0 0
        %619 = vmatpush1.bf16.msra.mxu0 %v585
        %620 = vmatprep.subr.bf16.mxu0 0
        %621 = vmatpush1.bf16.msra.mxu0 %v586
        %622 = vmatprep.subr.bf16.mxu0 0
        %623 = vmatpush1.bf16.msra.mxu0 %v587
        %624 = vmatprep.subr.bf16.mxu0 0
        %625 = vmatpush1.bf16.msra.mxu0 %v588
        %626 = vmatprep.subr.bf16.mxu0 0
        %627 = vmatpush1.bf16.msra.mxu0 %v589
        %628 = vmatprep.subr.bf16.mxu0 0
        %629 = vmatpush1.bf16.msra.mxu0 %v590
        %630 = vmatprep.subr.bf16.mxu0 0
        %631 = vmatpush1.bf16.msra.mxu0 %v591
        %632 = vmatprep.subr.bf16.mxu0 0
        %633 = vmatpush1.bf16.msra.mxu0 %v592
        %634 = vmatprep.subr.bf16.mxu0 0
        %635 = vmatpush1.bf16.msra.mxu0 %v593
        %636 = vmatprep.subr.bf16.mxu0 0
        %637 = vmatpush1.bf16.msra.mxu0 %v594
        %638 = vmatprep.subr.bf16.mxu0 0
        %639 = vmatpush1.bf16.msra.mxu0 %v595
        %640 = vmatprep.subr.bf16.mxu0 0
        %641 = vmatpush1.bf16.msra.mxu0 %v596
        %642 = vmatprep.subr.bf16.mxu0 0
        %643 = vmatpush1.bf16.msra.mxu0 %v597
        %644 = vmatprep.subr.bf16.mxu0 0
        %645 = vmatpush1.bf16.msra.mxu0 %v598
        %646 = vmatprep.subr.bf16.mxu0 0
        %647 = vmatpush1.bf16.msra.mxu0 %v599
        %648 = vmatprep.mubr.bf16.mxu0 %v480
        %649 = vmatmul.mubr.bf16.gmra.mrb[0].mxu0 %v479
        %v650 = vpop.f32.mrb[0].mxu0
        %v651 = vadd.f32 %v518, %v650
        %v652 = vpop.f32.mrb[0].mxu0
        %v653 = vpop.f32.mrb[0].mxu0
        %v654 = vadd.f32 %v518, %v653
        %v655 = vpop.f32.mrb[0].mxu0
        %656 = vdwg.mxu0
        %v657 = vmax.f32 %v651, 0.0
        %v658 = vmax.f32 %v654, 0.0
        %v659 = vpack.c.bf16 %v658, %v657
        %v660 = vld [vmem:[%s5] sm:$0xf]
        %v661 = vld [vmem:[%s5 + $0x4] sm:$0xf]
        %v662 = vld [vmem:[%s5 + $0x8] sm:$0xf]
        %v663 = vld [vmem:[%s5 + $0xc] sm:$0xf]
        %v664 = vld [vmem:[%s5 + $0x10] sm:$0xf]
        %v665 = vld [vmem:[%s5 + $0x14] sm:$0xf]
        %v666 = vld [vmem:[%s5 + $0x18] sm:$0xf]
        %v667 = vld [vmem:[%s5 + $0x1c] sm:$0xf]
        %v668 = vld [vmem:[%s5 + $0x20] sm:$0xf]
        %v669 = vld [vmem:[%s5 + $0x24] sm:$0xf]
        %v670 = vld [vmem:[%s5 + $0x28] sm:$0xf]
        %v671 = vld [vmem:[%s5 + $0x2c] sm:$0xf]
        %v672 = vld [vmem:[%s5 + $0x30] sm:$0xf]
        %v673 = vld [vmem:[%s5 + $0x34] sm:$0xf]
        %v674 = vld [vmem:[%s5 + $0x38] sm:$0xf]
        %v675 = vld [vmem:[%s5 + $0x3c] sm:$0xf]
        %v676 = vld [vmem:[%s6] sm:$0x1]
        %v678 = vlaneseq
        %v679 = vshrl.u32 %v678, 7
        %v680 = vsub.s32 0, %v679
        %v681 = vrot.slane %v676, %v680
        %v699 = vunpack.c.l.b16 %v660
        %v700 = vunpack.c.l.b16 %v661
        %v701 = vunpack.c.l.b16 %v662
        %v702 = vunpack.c.l.b16 %v663
        %v703 = vunpack.c.l.b16 %v664
        %v704 = vunpack.c.l.b16 %v665
        %v705 = vunpack.c.l.b16 %v666
        %v706 = vunpack.c.l.b16 %v667
        %v707 = vunpack.c.l.b16 %v668
        %v708 = vunpack.c.l.b16 %v669
        %v709 = vunpack.c.l.b16 %v670
        %v710 = vunpack.c.l.b16 %v671
        %v711 = vunpack.c.l.b16 %v672
        %v712 = vunpack.c.l.b16 %v673
        %v713 = vunpack.c.l.b16 %v674
        %v714 = vunpack.c.l.b16 %v675
        %v715 = vpack.c.b16 %v700, %v699
        %v716 = vpack.c.b16 %v702, %v701
        %v717 = vpack.c.b16 %v704, %v703
        %v718 = vpack.c.b16 %v706, %v705
        %v719 = vpack.c.b16 %v708, %v707
        %v720 = vpack.c.b16 %v710, %v709
        %v721 = vpack.c.b16 %v712, %v711
        %v722 = vpack.c.b16 %v714, %v713
        %731 = vmatprep.subr.bf16.mxu0 0
        %732 = vmatpush1.bf16.msra.mxu0 %v715
        %733 = vmatprep.subr.bf16.mxu0 0
        %734 = vmatpush1.bf16.msra.mxu0 %v716
        %735 = vmatprep.subr.bf16.mxu0 0
        %736 = vmatpush1.bf16.msra.mxu0 %v717
        %737 = vmatprep.subr.bf16.mxu0 0
        %738 = vmatpush1.bf16.msra.mxu0 %v718
        %739 = vmatprep.subr.bf16.mxu0 0
        %740 = vmatpush1.bf16.msra.mxu0 %v719
        %741 = vmatprep.subr.bf16.mxu0 0
        %742 = vmatpush1.bf16.msra.mxu0 %v720
        %743 = vmatprep.subr.bf16.mxu0 0
        %744 = vmatpush1.bf16.msra.mxu0 %v721
        %745 = vmatprep.subr.bf16.mxu0 0
        %746 = vmatpush1.bf16.msra.mxu0 %v722
        %747 = vmatprep.subr.bf16.mxu0 0
        %748 = vmatpush1.bf16.msra.mxu0 0
        %749 = vmatprep.subr.bf16.mxu0 0
        %750 = vmatpush1.bf16.msra.mxu0 0
        %751 = vmatprep.subr.bf16.mxu0 0
        %752 = vmatpush1.bf16.msra.mxu0 0
        %753 = vmatprep.subr.bf16.mxu0 0
        %754 = vmatpush1.bf16.msra.mxu0 0
        %755 = vmatprep.subr.bf16.mxu0 0
        %756 = vmatpush1.bf16.msra.mxu0 0
        %757 = vmatprep.subr.bf16.mxu0 0
        %758 = vmatpush1.bf16.msra.mxu0 0
        %759 = vmatprep.subr.bf16.mxu0 0
        %760 = vmatpush1.bf16.msra.mxu0 0
        %761 = vmatprep.subr.bf16.mxu0 0
        %762 = vmatpush1.bf16.msra.mxu0 0
        %763 = vmatprep.mubr.bf16.mxu0 0
        %764 = vmatmul.mubr.bf16.gmra.mrb[0].mxu0 %v659
        %v765 = vpop.f32.mrb[0].mxu0
        %v766 = vadd.f32 %v681, %v765
        %v767 = vpop.f32.mrb[0].mxu0
        %v768 = vpop.f32.mrb[0].mxu0
        %v769 = vadd.f32 %v681, %v768
        %v770 = vpop.f32.mrb[0].mxu0
        %771 = vdwg.mxu0
        %v772 = vmax.f32 %v766, 0.0
        %v773 = vmax.f32 %v769, 0.0
        %v774 = vpack.c.bf16 %v773, %v772
        %v775 = vld [vmem:[%s7] sm:$0xf]
        %v776 = vld [vmem:[%s7 + $0x4] sm:$0xf]
        %v777 = vld [vmem:[%s7 + $0x8] sm:$0xf]
        %v778 = vld [vmem:[%s7 + $0xc] sm:$0xf]
        %v779 = vld [vmem:[%s7 + $0x10] sm:$0xf]
        %v780 = vld [vmem:[%s7 + $0x14] sm:$0xf]
        %v781 = vld [vmem:[%s7 + $0x18] sm:$0xf]
        %v782 = vld [vmem:[%s7 + $0x1c] sm:$0xf]
        %v783 = vld [vmem:[%s8] sm:$0x1]
        %v785 = vlaneseq
        %v786 = vshrl.u32 %v785, 7
        %v787 = vsub.s32 0, %v786
        %v788 = vrot.slane %v783, %v787
        %v798 = vunpack.c.l.b16 %v775
        %v799 = vunpack.c.l.b16 %v776
        %v800 = vunpack.c.l.b16 %v777
        %v801 = vunpack.c.l.b16 %v778
        %v802 = vunpack.c.l.b16 %v779
        %v803 = vunpack.c.l.b16 %v780
        %v804 = vunpack.c.l.b16 %v781
        %v805 = vunpack.c.l.b16 %v782
        %v806 = vpack.c.b16 %v799, %v798
        %v807 = vpack.c.b16 %v801, %v800
        %v808 = vpack.c.b16 %v803, %v802
        %v809 = vpack.c.b16 %v805, %v804
        %vm814 = vcmask 523264
        %v816 = vsel %vm814, %v774, 0
        %818 = vmatprep.subr.bf16.mxu0 0
        %819 = vmatpush1.bf16.msra.mxu0 %v806
        %820 = vmatprep.subr.bf16.mxu0 0
        %821 = vmatpush1.bf16.msra.mxu0 %v807
        %822 = vmatprep.subr.bf16.mxu0 0
        %823 = vmatpush1.bf16.msra.mxu0 %v808
        %824 = vmatprep.subr.bf16.mxu0 0
        %825 = vmatpush1.bf16.msra.mxu0 %v809
        %826 = vmatprep.subr.bf16.mxu0 0
        %827 = vmatpush1.bf16.msra.mxu0 0
        %828 = vmatprep.subr.bf16.mxu0 0
        %829 = vmatpush1.bf16.msra.mxu0 0
        %830 = vmatprep.subr.bf16.mxu0 0
        %831 = vmatpush1.bf16.msra.mxu0 0
        %832 = vmatprep.subr.bf16.mxu0 0
        %833 = vmatpush1.bf16.msra.mxu0 0
        %834 = vmatprep.subr.bf16.mxu0 0
        %835 = vmatpush1.bf16.msra.mxu0 0
        %836 = vmatprep.subr.bf16.mxu0 0
        %837 = vmatpush1.bf16.msra.mxu0 0
        %838 = vmatprep.subr.bf16.mxu0 0
        %839 = vmatpush1.bf16.msra.mxu0 0
        %840 = vmatprep.subr.bf16.mxu0 0
        %841 = vmatpush1.bf16.msra.mxu0 0
        %842 = vmatprep.subr.bf16.mxu0 0
        %843 = vmatpush1.bf16.msra.mxu0 0
        %844 = vmatprep.subr.bf16.mxu0 0
        %845 = vmatpush1.bf16.msra.mxu0 0
        %846 = vmatprep.subr.bf16.mxu0 0
        %847 = vmatpush1.bf16.msra.mxu0 0
        %848 = vmatprep.subr.bf16.mxu0 0
        %849 = vmatpush1.bf16.msra.mxu0 0
        %850 = vmatprep.mubr.bf16.mxu0 0
        %851 = vmatmul.mubr.bf16.gmra.mrb[0].mxu0 %v816
        %v852 = vpop.f32.mrb[0].mxu0
        %v853 = vadd.f32 %v788, %v852
        %v854 = vpop.f32.mrb[0].mxu0
        %v855 = vpop.f32.mrb[0].mxu0
        %v856 = vadd.f32 %v788, %v855
        %v857 = vpop.f32.mrb[0].mxu0
        %858 = vdwg.mxu0
        %v859 = vmax.f32 %v853, 0.0
        %v860 = vmax.f32 %v856, 0.0
        %v861 = vpack.c.bf16 %v860, %v859
        %v862 = vld [vmem:[%s9] sm:$0xf]
        %v863 = vld [vmem:[%s9 + $0x4] sm:$0xf]
        %v864 = vld [vmem:[%s9 + $0x8] sm:$0xf]
        %v865 = vld [vmem:[%s9 + $0xc] sm:$0xf]
        %v866 = vld [vmem:[%s10] sm:$0x1]
        %v868 = vlaneseq
        %v869 = vshrl.u32 %v868, 7
        %v870 = vsub.s32 0, %v869
        %v871 = vrot.slane %v866, %v870
        %v877 = vunpack.c.l.b16 %v862
        %v878 = vunpack.c.l.b16 %v863
        %v879 = vunpack.c.l.b16 %v864
        %v880 = vunpack.c.l.b16 %v865
        %v881 = vpack.c.b16 %v878, %v877
        %v882 = vpack.c.b16 %v880, %v879
        %v886 = vsel %vm428, %v861, 0
        %888 = vmatprep.subr.bf16.mxu0 0
        %889 = vmatpush1.bf16.msra.mxu0 %v881
        %890 = vmatprep.subr.bf16.mxu0 0
        %891 = vmatpush1.bf16.msra.mxu0 %v882
        %892 = vmatprep.subr.bf16.mxu0 0
        %893 = vmatpush1.bf16.msra.mxu0 0
        %894 = vmatprep.subr.bf16.mxu0 0
        %895 = vmatpush1.bf16.msra.mxu0 0
        %896 = vmatprep.subr.bf16.mxu0 0
        %897 = vmatpush1.bf16.msra.mxu0 0
        %898 = vmatprep.subr.bf16.mxu0 0
        %899 = vmatpush1.bf16.msra.mxu0 0
        %900 = vmatprep.subr.bf16.mxu0 0
        %901 = vmatpush1.bf16.msra.mxu0 0
        %902 = vmatprep.subr.bf16.mxu0 0
        %903 = vmatpush1.bf16.msra.mxu0 0
        %904 = vmatprep.subr.bf16.mxu0 0
        %905 = vmatpush1.bf16.msra.mxu0 0
        %906 = vmatprep.subr.bf16.mxu0 0
        %907 = vmatpush1.bf16.msra.mxu0 0
        %908 = vmatprep.subr.bf16.mxu0 0
        %909 = vmatpush1.bf16.msra.mxu0 0
        %910 = vmatprep.subr.bf16.mxu0 0
        %911 = vmatpush1.bf16.msra.mxu0 0
        %912 = vmatprep.subr.bf16.mxu0 0
        %913 = vmatpush1.bf16.msra.mxu0 0
        %914 = vmatprep.subr.bf16.mxu0 0
        %915 = vmatpush1.bf16.msra.mxu0 0
        %916 = vmatprep.subr.bf16.mxu0 0
        %917 = vmatpush1.bf16.msra.mxu0 0
        %918 = vmatprep.subr.bf16.mxu0 0
        %919 = vmatpush1.bf16.msra.mxu0 0
        %920 = vmatprep.mubr.bf16.mxu0 0
        %921 = vmatmul.mubr.bf16.gmra.mrb[0].mxu0 %v886
        %v922 = vpop.f32.mrb[0].mxu0
        %v923 = vadd.f32 %v871, %v922
        %v924 = vpop.f32.mrb[0].mxu0
        %v925 = vpop.f32.mrb[0].mxu0
        %v926 = vadd.f32 %v871, %v925
        %v927 = vpop.f32.mrb[0].mxu0
        %928 = vdwg.mxu0
        %v929 = vsub.f32 0.0, %v923
        %v930 = vsub.f32 0.0, %v926
        %v931 = vmul.f32 %v929, 1.442695
        %v932 = vpow.pop %v931
        %v933 = vmul.f32 %v930, 1.442695
        %v934 = vpow.pop %v933
        %v935 = vadd.f32 %v932, 1.0
        %v936 = vadd.f32 %v934, 1.0
        %v937 = vrcp.pop %v935
        %v938 = vrcp.pop %v936
        %939 = vst [vmem:[%s380] sm:$0xff] %v937
        %940 = vst [vmem:[%s380 + $0x8] sm:$0xff] %v938
        %s941 = sand.u32 %s269, 1
        %s942 = scalar_lea.sflag [#allocation3], %s941
        %s943 = sand.u32 %s269, 1
        %s944 = smul.addr %s943, 16
        %s945 = scalar_lea.vmem [#allocation2], %s944
        // Predicated region
        $region65: #{tpu_custom_call.1} parent=63 // pred_check
          %p946 = pneg %p279
        $region66: #{tpu_custom_call.1} parent=63 // pred_check_branch
          %948 = sbr.rel (%p946) target = $region68
        $region67: #{tpu_custom_call.1} parent=63 // pred_region
          %s949 = smul.u32 2, %s25
          %s951 = ssub.s32 256, 256
          %952 = vsyncadd %s942, %s951
          %s953 = smul.addr %s949, 128
          %s954 = scalar_lea.hbm %s11, %s953
          %s955 = sshll.u32 %s945, 4
          %s956 = int_to_ptr.vmem [resolvable:$true] %s955
          %961 = dma.vmem_to_hbm [thread:$0]  %s956, 256, %s954, %s942, 128, 128, 8
        $region68: #{tpu_custom_call.1} parent=63 // pred_fallthru
          _
      $region64: #{tpu_custom_call.1} parent=5 // pred_fallthru
        _
      %p962 = scmp.le.s32.totalorder 2, %s20
      // Predicated region
      $region69: #{tpu_custom_call.1} parent=5 // pred_check
        %p963 = pneg %p962
      $region70: #{tpu_custom_call.1} parent=5 // pred_check_branch
        %965 = sbr.rel (%p963) target = $region72
      $region71: #{tpu_custom_call.1} parent=5 // pred_region
        %s966 = ssub.s32 %s20, 2
        // Predicated region
        $region73: #{tpu_custom_call.1} parent=71 // pred_check
          %p967 = pneg %p285
        $region74: #{tpu_custom_call.1} parent=71 // pred_check_branch
          %969 = sbr.rel (%p967) target = $region76
        $region75: #{tpu_custom_call.1} parent=71 // pred_region
          %s970 = sand.u32 %s270, 1
          %s971 = scalar_lea.sflag [#allocation3], %s970
          %s972 = sand.u32 %s270, 1
          %s973 = smul.addr %s972, 16
          %s974 = scalar_lea.vmem [#allocation2], %s973
          %975 = dma.done %s971, 256
        $region76: #{tpu_custom_call.1} parent=71 // pred_fallthru
          _
      $region72: #{tpu_custom_call.1} parent=5 // pred_fallthru
        _
    $region6: #{tpu_custom_call.1} parent=1 // loop_footer
      %s24 = sadd.s32 1, %s20
    $region7: #{tpu_custom_call.1} parent=1 // loop_footer_branch
      %19 = sbr.rel target = $region3
    $region8: #{tpu_custom_call.1} parent=1 // loop_exit
      _
    %976 = vsyncpa [#allocation3], 1
    %s977 = scalar_lea.sflag [#allocation3], 1
    %978 = vsyncpa %s977, 1

</llo_original>
